<compile_context>
chip_gen: v7x
topology: tpu7x:2x2x1
jax: 0.10.0
libtpu: 0.0.40
codegen_flags: <defaults>
</compile_context>

<pallas_src>
import functools

import jax
import jax.numpy as jnp
from jax.experimental import pallas as pl
from jax.experimental.pallas import tpu as pltpu


def _addcoords_kernel(x_ref, *rest, sx, sy, W, with_r, with_boundary):
    # x_ref: (1, C, tS, 128)  [bmap_ref: (1, 1, tS, 128)]  o_ref: (1, C_out, tS, 128)
    if with_boundary:
        bmap_ref, o_ref = rest
    else:
        (o_ref,) = rest
        bmap_ref = None

    C = x_ref.shape[1]
    tS = o_ref.shape[2]
    dtype = o_ref.dtype

    # 1) Pass-through of the input channels (dense (tS,128) tiles).
    o_ref[:, :C, :, :] = x_ref[...]

    # 2) Flat spatial index covered by this tile: f = x*W + y = row*128 + lane.
    base = pl.program_id(1) * (tS * 128)
    shape = (1, 1, tS, 128)
    f = (base
         + jax.lax.broadcasted_iota(jnp.int32, shape, 2) * 128
         + jax.lax.broadcasted_iota(jnp.int32, shape, 3))

    # x = f // W, y = f - x*W via float multiply + exact +/-1 integer
    # correction (avoids vector integer division).  Exact while H < 2^22
    # (guarded in the wrapper) -- any realistic spatial size.
    xi = jnp.floor(f.astype(jnp.float32) * (1.0 / W)).astype(jnp.int32)
    xi = jnp.where(xi * W > f, xi - 1, xi)
    xi = jnp.where((xi + 1) * W <= f, xi + 1, xi)
    yi = f - xi * W

    # Single multiply + add per element (scales precomputed in Python).
    xx = xi.astype(jnp.float32) * sx - 1.0
    yy = yi.astype(jnp.float32) * sy - 1.0
    xx_d = xx.astype(dtype)
    yy_d = yy.astype(dtype)

    o_ref[:, C:C + 1, :, :] = xx_d
    o_ref[:, C + 1:C + 2, :, :] = yy_d

    idx = C + 2
    if with_r:
        # Subtract / square / sqrt in the output dtype (matches PyTorch).
        rr = jnp.sqrt((xx_d - 0.5) ** 2 + (yy_d - 0.5) ** 2)
        o_ref[:, idx:idx + 1, :, :] = rr.astype(dtype)
        idx += 1

    if with_boundary:
        # clamp(bm,0,1) > 0.05  ==  bm > 0.05 (NaN compares false either way).
        mask = (bmap_ref[...] > 0.05).astype(dtype)          # (1, 1, tS, 128)
        o_ref[:, idx:idx + 1, :, :] = xx_d * mask
        o_ref[:, idx + 1:idx + 2, :, :] = yy_d * mask


def _vmem_budget():
    """Pick (working-set budget, vmem_limit_bytes) for this chip generation."""
    cap = None
    try:
        cap = getattr(pltpu.get_tpu_info(), "vmem_capacity_bytes", None)
    except Exception:
        cap = None
    if cap is not None and cap >= 128 * 1024 * 1024:      # v5e / v6e
        return 32 * 1024 * 1024, 64 * 1024 * 1024
    return 16 * 1024 * 1024, 32 * 1024 * 1024             # v7x / unknown: conservative


def add_coords(x, boundary_map=None, *, with_r=False, with_boundary=False):
    """Pallas implementation of AddCoords.forward (NCHW layout)."""
    B, C, H, W = x.shape
    # Matches PyTorch: boundary channels only if with_boundary AND a map is given.
    use_boundary = with_boundary and (boundary_map is not None)
    C_out = C + 2 + (1 if with_r else 0) + (2 if use_boundary else 0)
    dtype = x.dtype
    itemsize = jnp.dtype(dtype).itemsize

    if H >= (1 << 22):
        # TODO(synk): float-reciprocal row reconstruction loses exactness here.
        raise NotImplementedError("add_coords: x_dim >= 2^22 not supported")

    # Match PyTorch's x/(dim-1) behavior (nan for dim==1) without a Python error.
    sx = 2.0 / (H - 1) if H > 1 else float("nan")
    sy = 2.0 / (W - 1) if W > 1 else float("nan")

    # Lane-dense re-tiling of the spatial dims: (B, C, nrows, 128).
    L = H * W
    L_pad = ((L + 127) // 128) * 128
    nrows = L_pad // 128

    x_flat = x.reshape(B, C, L)
    if L_pad != L:
        x_flat = jnp.pad(x_flat, ((0, 0), (0, 0), (0, L_pad - L)))
    x_tiled = x_flat.reshape(B, C, nrows, 128)

    bmap_itemsize = 0
    inputs = [x_tiled]
    if use_boundary:
        bmap_itemsize = jnp.dtype(boundary_map.dtype).itemsize
        bm_flat = boundary_map.reshape(B, 1, L)
        if L_pad != L:
            bm_flat = jnp.pad(bm_flat, ((0, 0), (0, 0), (0, L_pad - L)))
        inputs.append(bm_flat.reshape(B, 1, nrows, 128))

    # Spatial-row tile size: sublane-padding-aware VMEM sizing.
    sub = max(8, 32 // itemsize)                  # rows per vreg: 8 f32, 16 bf16, 32 i8
    budget, vmem_limit = _vmem_budget()
    # Double-buffered bytes per (padded) row of 128 lanes: input + output (+ bmap).
    per_row = 2 * 128 * ((C + C_out) * itemsize + bmap_itemsize)

    def _block_bytes(ts):
        ts_pad = ((ts + sub - 1) // sub) * sub
        return per_row * ts_pad

    if _block_bytes(nrows) <= budget:
        tS = nrows
    else:
        tS = min(nrows, max(sub, (budget // (per_row * sub)) * sub))
    n_tiles = pl.cdiv(nrows, tS)

    # v7x megacore: ensure at least 2 parallel grid steps when possible.
    if B * n_tiles < 2 and nrows > sub:
        half = -(-nrows // 2)
        cand = ((half + sub - 1) // sub) * sub
        if cand < nrows:
            tS = cand
            n_tiles = pl.cdiv(nrows, tS)

    kernel = functools.partial(
        _addcoords_kernel, sx=sx, sy=sy, W=W,
        with_r=with_r, with_boundary=use_boundary)

    in_specs = [pl.BlockSpec((1, C, tS, 128), lambda b, t: (b, 0, t, 0))]
    if use_boundary:
        in_specs.append(pl.BlockSpec((1, 1, tS, 128), lambda b, t: (b, 0, t, 0)))

    bytes_in = B * C * L_pad * itemsize
    if use_boundary:
        bytes_in += B * L_pad * bmap_itemsize
    bytes_out = B * C_out * L_pad * itemsize
    cost = pl.CostEstimate(
        flops=12 * B * L_pad,
        transcendentals=(B * L_pad) if with_r else 0,
        bytes_accessed=bytes_in + bytes_out)

    out_tiled = pl.pallas_call(
        kernel,
        out_shape=jax.ShapeDtypeStruct((B, C_out, nrows, 128), dtype),
        grid_spec=pltpu.PrefetchScalarGridSpec(
            num_scalar_prefetch=0,
            grid=(B, n_tiles),
            in_specs=in_specs,
            out_specs=pl.BlockSpec((1, C_out, tS, 128), lambda b, t: (b, 0, t, 0)),
        ),
        compiler_params=pltpu.CompilerParams(
            dimension_semantics=("parallel", "parallel"),
            vmem_limit_bytes=vmem_limit),
        cost_estimate=cost,
    )(*inputs)

    out_flat = out_tiled.reshape(B, C_out, L_pad)
    if L_pad != L:
        out_flat = out_flat[:, :, :L]
    return out_flat.reshape(B, C_out, H, W)


def add_coords_ref(x, boundary_map=None, *, with_r=False, with_boundary=False):
    """Pure-JAX reference matching the PyTorch forward exactly."""
    B, C, H, W = x.shape
    xs = jnp.arange(H, dtype=jnp.float32)
    ys = jnp.arange(W, dtype=jnp.float32)
    xx = (xs / (H - 1)) * 2.0 - 1.0          # depends on x index (dim 2)
    yy = (ys / (W - 1)) * 2.0 - 1.0          # depends on y index (dim 3)
    xx = jnp.broadcast_to(xx[None, None, :, None], (B, 1, H, W)).astype(x.dtype)
    yy = jnp.broadcast_to(yy[None, None, None, :], (B, 1, H, W)).astype(x.dtype)
    parts = [x, xx, yy]
    if with_r:
        rr = jnp.sqrt((xx - 0.5) ** 2 + (yy - 0.5) ** 2)
        parts.append(rr.astype(x.dtype))
    if with_boundary and boundary_map is not None:
        bm = jnp.clip(boundary_map, 0.0, 1.0)[:, None, :, :]
        mask = bm > 0.05
        zeros = jnp.zeros_like(xx)
        parts.append(jnp.where(mask, xx, zeros).astype(x.dtype))
        parts.append(jnp.where(mask, yy, zeros).astype(x.dtype))
    return jnp.concatenate(parts, axis=1)


if __name__ == "__main__":
    key = jax.random.PRNGKey(0)
    kx, kb, kx2, kb2, kx3 = jax.random.split(key, 5)

    B, C, H, W = 2, 4, 16, 16
    x = jax.random.normal(kx, (B, C, H, W), dtype=jnp.float32)
    boundary_map = jax.random.uniform(kb, (B, H, W), dtype=jnp.float32)

    # Default config (with_r=False, with_boundary=False).
    out_basic = jax.block_until_ready(add_coords(x))
    ref_basic = add_coords_ref(x)
    assert out_basic.shape == (B, C + 2, H, W)
    assert jnp.allclose(out_basic, ref_basic, atol=1e-6), "basic mismatch"

    # Full config exercising with_r and with_boundary paths.
    out_full = jax.block_until_ready(
        add_coords(x, boundary_map, with_r=True, with_boundary=True))
    ref_full = add_coords_ref(x, boundary_map, with_r=True, with_boundary=True)
    assert out_full.shape == (B, C + 5, H, W)
    assert jnp.allclose(out_full, ref_full, atol=1e-6), "full mismatch"

    # Non-multiple-of-128 spatial size (exercises the wrapper-side pad/slice).
    B2, C2, H2, W2 = 2, 3, 12, 20
    x2 = jax.random.normal(kx2, (B2, C2, H2, W2), dtype=jnp.float32)
    bm2 = jax.random.uniform(kb2, (B2, H2, W2), dtype=jnp.float32)
    out2 = jax.block_until_ready(
        add_coords(x2, bm2, with_r=True, with_boundary=True))
    ref2 = add_coords_ref(x2, bm2, with_r=True, with_boundary=True)
    assert out2.shape == (B2, C2 + 5, H2, W2)
    assert jnp.allclose(out2, ref2, atol=1e-6), "odd-shape mismatch"

    # Batch 1 / larger spatial: exercises the multi-tile + megacore-split path.
    B3, C3, H3, W3 = 1, 4, 32, 64
    x3 = jax.random.normal(kx3, (B3, C3, H3, W3), dtype=jnp.float32)
    out3 = jax.block_until_ready(add_coords(x3, with_r=True))
    ref3 = add_coords_ref(x3, with_r=True)
    assert out3.shape == (B3, C3 + 3, H3, W3)
    assert jnp.allclose(out3, ref3, atol=1e-6), "multi-tile mismatch"

    print("KERNEL_OK")
</pallas_src>

<mosaic_0001>
module attributes {stable_mosaic.version = 11 : i64} {
  func.func @_addcoords_kernel(%arg0: i32, %arg1: i32, %arg2: memref<1x4x2x128xf32, #tpu.memory_space<vmem>>, %arg3: memref<1x6x2x128xf32, #tpu.memory_space<vmem>>) attributes {dimension_semantics = [#tpu.dimension_semantics<parallel>, #tpu.dimension_semantics<parallel>], iteration_bounds = array<i64: 2, 1>, scalar_prefetch = 0 : i64, scratch_operands = 0 : i64, tpu.core_type = #tpu.core_type<tc>, window_params = [{transform_indices = @transform_0, window_bounds = array<i64: 1, 4, 2, 128>}, {transform_indices = @transform_1, window_bounds = array<i64: 1, 6, 2, 128>}]} {
    %c0 = arith.constant 0 : index
    %c0_0 = arith.constant 0 : index
    %c0_1 = arith.constant 0 : index
    %c0_2 = arith.constant 0 : index
    %0 = vector.load %arg2[%c0, %c0_0, %c0_1, %c0_2] : memref<1x4x2x128xf32, #tpu.memory_space<vmem>>, vector<1x4x2x128xf32>
    %c0_3 = arith.constant 0 : index
    %c0_4 = arith.constant 0 : index
    %c0_5 = arith.constant 0 : index
    %c0_6 = arith.constant 0 : index
    %1 = vector.load %arg3[%c0_3, %c0_4, %c0_5, %c0_6] : memref<1x6x2x128xf32, #tpu.memory_space<vmem>>, vector<1x4x2x128xf32>
    tpu.vector_store %arg3[%c0_3, %c0_4, %c0_5, %c0_6], %0 {strides = array<i32>} : memref<1x6x2x128xf32, #tpu.memory_space<vmem>>, vector<1x4x2x128xf32>,
    %c256_i32 = arith.constant 256 : i32
    %2 = arith.muli %arg1, %c256_i32 : i32
    %3 = tpu.iota {dimensions = array<i32: 2>} : vector<1x1x2x128xi32>
    %c128_i32 = arith.constant 128 : i32
    %4 = vector.broadcast %c128_i32 : i32 to vector<1x1x2x128xi32>
    %5 = arith.muli %3, %4 : vector<1x1x2x128xi32>
    %6 = vector.broadcast %2 : i32 to vector<1x1x2x128xi32>
    %7 = arith.addi %6, %5 : vector<1x1x2x128xi32>
    %8 = tpu.iota {dimensions = array<i32: 3>} : vector<1x1x2x128xi32>
    %9 = arith.addi %7, %8 : vector<1x1x2x128xi32>
    %10 = arith.sitofp %9 : vector<1x1x2x128xi32> to vector<1x1x2x128xf32>
    %cst = arith.constant 6.250000e-02 : f32
    %11 = vector.broadcast %cst : f32 to vector<1x1x2x128xf32>
    %12 = arith.mulf %10, %11 : vector<1x1x2x128xf32>
    %13 = math.floor %12 : vector<1x1x2x128xf32>
    %14 = arith.fptosi %13 : vector<1x1x2x128xf32> to vector<1x1x2x128xi32>
    %c16_i32 = arith.constant 16 : i32
    %15 = vector.broadcast %c16_i32 : i32 to vector<1x1x2x128xi32>
    %16 = arith.muli %14, %15 : vector<1x1x2x128xi32>
    %17 = arith.cmpi sgt, %16, %9 : vector<1x1x2x128xi32>
    %c1_i32 = arith.constant 1 : i32
    %18 = vector.broadcast %c1_i32 : i32 to vector<1x1x2x128xi32>
    %19 = arith.subi %14, %18 : vector<1x1x2x128xi32>
    %20 = arith.select %17, %19, %14 : vector<1x1x2x128xi1>, vector<1x1x2x128xi32>
    %c1_i32_7 = arith.constant 1 : i32
    %21 = vector.broadcast %c1_i32_7 : i32 to vector<1x1x2x128xi32>
    %22 = arith.addi %20, %21 : vector<1x1x2x128xi32>
    %c16_i32_8 = arith.constant 16 : i32
    %23 = vector.broadcast %c16_i32_8 : i32 to vector<1x1x2x128xi32>
    %24 = arith.muli %22, %23 : vector<1x1x2x128xi32>
    %25 = arith.cmpi sle, %24, %9 : vector<1x1x2x128xi32>
    %c1_i32_9 = arith.constant 1 : i32
    %26 = vector.broadcast %c1_i32_9 : i32 to vector<1x1x2x128xi32>
    %27 = arith.addi %20, %26 : vector<1x1x2x128xi32>
    %28 = arith.select %25, %27, %20 : vector<1x1x2x128xi1>, vector<1x1x2x128xi32>
    %c16_i32_10 = arith.constant 16 : i32
    %29 = vector.broadcast %c16_i32_10 : i32 to vector<1x1x2x128xi32>
    %30 = arith.muli %28, %29 : vector<1x1x2x128xi32>
    %31 = arith.subi %9, %30 : vector<1x1x2x128xi32>
    %32 = arith.sitofp %28 : vector<1x1x2x128xi32> to vector<1x1x2x128xf32>
    %cst_11 = arith.constant 0.13333334 : f32
    %33 = vector.broadcast %cst_11 : f32 to vector<1x1x2x128xf32>
    %34 = arith.mulf %32, %33 : vector<1x1x2x128xf32>
    %cst_12 = arith.constant 1.000000e+00 : f32
    %35 = vector.broadcast %cst_12 : f32 to vector<1x1x2x128xf32>
    %36 = arith.subf %34, %35 : vector<1x1x2x128xf32>
    %37 = arith.sitofp %31 : vector<1x1x2x128xi32> to vector<1x1x2x128xf32>
    %cst_13 = arith.constant 0.13333334 : f32
    %38 = vector.broadcast %cst_13 : f32 to vector<1x1x2x128xf32>
    %39 = arith.mulf %37, %38 : vector<1x1x2x128xf32>
    %cst_14 = arith.constant 1.000000e+00 : f32
    %40 = vector.broadcast %cst_14 : f32 to vector<1x1x2x128xf32>
    %41 = arith.subf %39, %40 : vector<1x1x2x128xf32>
    %c0_15 = arith.constant 0 : index
    %c4 = arith.constant 4 : index
    %c0_16 = arith.constant 0 : index
    %c0_17 = arith.constant 0 : index
    %42 = vector.load %arg3[%c0_15, %c4, %c0_16, %c0_17] : memref<1x6x2x128xf32, #tpu.memory_space<vmem>>, vector<1x1x2x128xf32>
    tpu.vector_store %arg3[%c0_15, %c4, %c0_16, %c0_17], %36 {strides = array<i32>} : memref<1x6x2x128xf32, #tpu.memory_space<vmem>>, vector<1x1x2x128xf32>,
    %c0_18 = arith.constant 0 : index
    %c5 = arith.constant 5 : index
    %c0_19 = arith.constant 0 : index
    %c0_20 = arith.constant 0 : index
    %43 = vector.load %arg3[%c0_18, %c5, %c0_19, %c0_20] : memref<1x6x2x128xf32, #tpu.memory_space<vmem>>, vector<1x1x2x128xf32>
    tpu.vector_store %arg3[%c0_18, %c5, %c0_19, %c0_20], %41 {strides = array<i32>} : memref<1x6x2x128xf32, #tpu.memory_space<vmem>>, vector<1x1x2x128xf32>,
    return
  }
  func.func @transform_0(%arg0: i32, %arg1: i32) -> (i32, i32, i32, i32) {
    %c0_i32 = arith.constant 0 : i32
    %c0_i32_0 = arith.constant 0 : i32
    %c0_i32_1 = arith.constant 0 : i32
    return %arg0, %c0_i32, %arg1, %c0_i32_0 : i32, i32, i32, i32
  }
  func.func @transform_1(%arg0: i32, %arg1: i32) -> (i32, i32, i32, i32) {
    %c0_i32 = arith.constant 0 : i32
    %c0_i32_0 = arith.constant 0 : i32
    %c0_i32_1 = arith.constant 0 : i32
    return %arg0, %c0_i32, %arg1, %c0_i32_0 : i32, i32, i32, i32
  }
}

</mosaic_0001>

<llo_original>
// kernel: tpu_custom_call.1
$region0: #{tpu_custom_call.1}
  #allocation0 [shape = 'u32[]', space=smem, size = 0x4, offset = 0x4, fixed_abs, tag = 'smem constant byte address 0x4 - core index']
  #allocation1 [shape = 'u32[144,128]{1,0:T(1,128)}', space=vmem, size = 0x12000, scoped, tag = 'internal scratch']
  %s0 = inlined_call_operand.hbm [shape: f32[2,4,2,128], index: 0, kind: input, shape index: {}]
  %s1 = inlined_call_operand.hbm [shape: f32[2,6,2,128], index: 1, kind: output, shape index: {}]
  %s2 = sld [smem:[#allocation0]]
  $region41: #{tpu_custom_call.1} parent=0
    _
  %s4 = ssub.s32 1, %s2
  %s5 = scalar_select 0, %s4, %s2
  $region1: #{tpu_custom_call.1} parent=0
    #allocation2 [shape = 'u8[8192]{0}', space=vmem, size = 0x2000, scoped, tag = 'input window, operand 0']
    #allocation3 [shape = 's32[2]{0}', space=sflag, size = 0x8, scoped, tag = 'scoped memory for tpu_custom_call.1']
    #allocation4 [shape = 's32[2]{0}', space=sflag, size = 0x8, scoped, tag = 'scoped memory for tpu_custom_call.1']
    #allocation5 [shape = 'u8[12288]{0}', space=vmem, size = 0x3000, scoped, tag = 'output window, operand 0']
    %6 = vsyncpa [#allocation3], 0
    %s7 = scalar_lea.sflag [#allocation3], 1
    %8 = vsyncpa %s7, 0
    %9 = vsyncpa [#allocation4], 0
    %s10 = scalar_lea.sflag [#allocation4], 1
    %11 = vsyncpa %s10, 0
    loop: start=0, step=1, limit=4
    $region2: #{tpu_custom_call.1} parent=1 // loop_pre_header
      _
    $region3: #{tpu_custom_call.1} parent=1 // loop_header
      %s13 = sphi 0, %s17
      %p14 = scmp.ge.s32.totalorder %s13, 4
      %s20 = sphi 0, %s32
      %s21 = sphi 0, %s28
      %s22 = sphi 0, %s20
      %s23 = sphi 0, %s21
      %s24 = sphi 0, %s22
      %s25 = sphi 0, %s23
      %s37 = sphi 0, %s39
      %s40 = sphi 0, %s37
      %s41 = sphi 0, %s40
      %s57 = sphi 0, %s41
      %s65 = sphi 0, %s67
      %s68 = sphi 0, %s65
      %s69 = sphi 0, %s68
      %s85 = sphi 0, %s69
    $region4: #{tpu_custom_call.1} parent=1 // loop_header_branch
      %16 = sbr.rel (%p14) target = $region8
    $region5: #{tpu_custom_call.1} parent=1 // loop_body
      %s18 = ssub.s32 %s13, 1
      %s19 = ssub.s32 %s13, 2
      %s26 = sadd.s32 1, %s21
      %p27 = scmp.ge.s32.totalorder %s26, 1
      %s28 = scalar_select %p27, 0, %s26
      %s29 = sadd.s32 1, %s20
      %s30 = scalar_select %p27, %s29, %s20
      %p31 = scmp.ge.s32.totalorder %s30, 2
      %s32 = scalar_select %p31, 0, %s30
      %s33 = ssub.s32 %s20, %s32
      %s34 = ssub.s32 %s21, %s28
      %s35 = sor.u32 %s33, %s34
      %p36 = scmp.eq.s32.totalorder %s35, 0
      %s38 = sadd.s32 %s37, 1
      %s39 = scalar_select %p36, %s37, %s38
      %p42 = pneg %p36
      %p43 = scmp.eq.s32.totalorder %s13, 1
      %p44 = por %p42, %p43
      %p45 = scmp.ne.s32.totalorder %s37, %s40
      %p46 = scmp.eq.s32.totalorder %s13, 0
      %p47 = por %p45, %p46
      %p48 = scmp.ne.s32.totalorder %s37, %s40
      %p49 = scmp.eq.s32.totalorder %s18, 1
      %p50 = por %p48, %p49
      %p51 = scmp.ne.s32.totalorder %s40, %s41
      %p52 = scmp.eq.s32.totalorder %s18, 0
      %p53 = por %p51, %p52
      %p54 = scmp.ne.s32.totalorder %s40, %s41
      %p55 = scmp.eq.s32.totalorder %s19, 1
      %p56 = por %p54, %p55
      %p58 = scmp.ne.s32.totalorder %s41, %s57
      %p59 = scmp.eq.s32.totalorder %s19, 0
      %p60 = por %p58, %p59
      %s61 = ssub.s32 %s20, %s32
      %s62 = ssub.s32 %s21, %s28
      %s63 = sor.u32 %s61, %s62
      %p64 = scmp.eq.s32.totalorder %s63, 0
      %s66 = sadd.s32 %s65, 1
      %s67 = scalar_select %p64, %s65, %s66
      %p70 = pneg %p64
      %p71 = scmp.eq.s32.totalorder %s13, 1
      %p72 = por %p70, %p71
      %p73 = scmp.ne.s32.totalorder %s65, %s68
      %p74 = scmp.eq.s32.totalorder %s13, 0
      %p75 = por %p73, %p74
      %p76 = scmp.ne.s32.totalorder %s65, %s68
      %p77 = scmp.eq.s32.totalorder %s18, 1
      %p78 = por %p76, %p77
      %p79 = scmp.ne.s32.totalorder %s68, %s69
      %p80 = scmp.eq.s32.totalorder %s18, 0
      %p81 = por %p79, %p80
      %p82 = scmp.ne.s32.totalorder %s68, %s69
      %p83 = scmp.eq.s32.totalorder %s19, 1
      %p84 = por %p82, %p83
      %p86 = scmp.ne.s32.totalorder %s69, %s85
      %p87 = scmp.eq.s32.totalorder %s19, 0
      %p88 = por %p86, %p87
      %p89 = scmp.le.s32.totalorder 1, %s13
      %p90 = scmp.lt.s32.totalorder %s13, 3
      %p91 = pnand %p89, %p90
      %p92 = pneg %p91
      // Predicated region
      $region9: #{tpu_custom_call.1} parent=5 // pred_check
        _
      $region10: #{tpu_custom_call.1} parent=5 // pred_check_branch
        %94 = sbr.rel (%p91) target = $region12
      $region11: #{tpu_custom_call.1} parent=5 // pred_region
        %s95 = ssub.s32 %s13, 1
      $region12: #{tpu_custom_call.1} parent=5 // pred_fallthru
        _
      %p96 = scmp.lt.s32.totalorder %s13, 2
      // Predicated region
      $region13: #{tpu_custom_call.1} parent=5 // pred_check
        %p97 = pneg %p96
      $region14: #{tpu_custom_call.1} parent=5 // pred_check_branch
        %99 = sbr.rel (%p97) target = $region16
      $region15: #{tpu_custom_call.1} parent=5 // pred_region
        // Predicated region
        $region17: #{tpu_custom_call.1} parent=15 // pred_check
          %p100 = pneg %p47
        $region18: #{tpu_custom_call.1} parent=15 // pred_check_branch
          %102 = sbr.rel (%p100) target = $region20
        $region19: #{tpu_custom_call.1} parent=15 // pred_region
          %s103 = sand.u32 %s37, 1
          %s104 = scalar_lea.sflag [#allocation3], %s103
          %s105 = sand.u32 %s37, 1
          %s106 = smul.addr %s105, 8
          %s107 = scalar_lea.vmem [#allocation2], %s106
          %s109 = ssub.s32 128, 128
          %110 = vsyncadd %s104, %s109
          %s111 = smul.addr %s20, 4
          %s112 = sadd.s32 %s21, %s111
          %s113 = smul.addr %s112, 32
          %s114 = scalar_lea.hbm %s0, %s113
          %s115 = sshll.u32 %s107, 4
          %s116 = int_to_ptr.vmem [resolvable:$true] %s115
          %121 = dma.hbm_to_vmem [thread:$0]  %s114, 128, %s116, %s104, 32, 32, 2
        $region20: #{tpu_custom_call.1} parent=15 // pred_fallthru
          _
      $region16: #{tpu_custom_call.1} parent=5 // pred_fallthru
        _
      %p122 = scmp.le.s32.totalorder 1, %s13
      %p123 = scmp.lt.s32.totalorder %s13, 3
      %p124 = pnand %p122, %p123
      %p125 = pneg %p124
      // Predicated region
      $region21: #{tpu_custom_call.1} parent=5 // pred_check
        _
      $region22: #{tpu_custom_call.1} parent=5 // pred_check_branch
        %127 = sbr.rel (%p124) target = $region24
      $region23: #{tpu_custom_call.1} parent=5 // pred_region
        %s128 = ssub.s32 %s13, 1
        %s129 = sand.u32 %s40, 1
        %s130 = scalar_lea.sflag [#allocation3], %s129
        %s131 = sand.u32 %s40, 1
        %s132 = smul.addr %s131, 8
        %s133 = scalar_lea.vmem [#allocation2], %s132
        // Predicated region
        $region25: #{tpu_custom_call.1} parent=23 // pred_check
          %p134 = pneg %p53
        $region26: #{tpu_custom_call.1} parent=23 // pred_check_branch
          %136 = sbr.rel (%p134) target = $region28
        $region27: #{tpu_custom_call.1} parent=23 // pred_region
          %137 = dma.done %s130, 128
        $region28: #{tpu_custom_call.1} parent=23 // pred_fallthru
          _
        %s138 = sand.u32 %s40, 1
        %s139 = scalar_lea.sflag [#allocation3], %s138
        %s140 = sand.u32 %s40, 1
        %s141 = smul.addr %s140, 8
        %s142 = scalar_lea.vmem [#allocation2], %s141
        %p143 = pneg %p53
        %p144 = pneg %p50
        %p145 = pneg %p81
        %p146 = pneg %p78
        %s147 = sand.u32 %s68, 1
        %s148 = scalar_lea.sflag [#allocation4], %s147
        %s149 = sand.u32 %s68, 1
        %s150 = smul.addr %s149, 12
        %s151 = scalar_lea.vmem [#allocation5], %s150
        %v152 = vld [vmem:[%s133] sm:$0x3]
        %v153 = vld [vmem:[%s133 + $0x2] sm:$0x3]
        %v154 = vld [vmem:[%s133 + $0x4] sm:$0x3]
        %v155 = vld [vmem:[%s133 + $0x6] sm:$0x3]
        %156 = vst [vmem:[%s151] sm:$0x3] %v152
        %157 = vst [vmem:[%s151 + $0x2] sm:$0x3] %v153
        %158 = vst [vmem:[%s151 + $0x4] sm:$0x3] %v154
        %159 = vst [vmem:[%s151 + $0x6] sm:$0x3] %v155
        %s160 = smul.u32 %s23, 256
        %v161 = vlaneseq
        %v162 = vshrl.u32 %v161, 7
        %v163 = vmul.u32 %v162, 128
        %v164 = vstv %s160
        %v165 = vadd.s32 %v164, %v163
        %v166 = vlaneseq
        %v167 = vand.u32 %v166, 127
        %v168 = vadd.s32 %v165, %v167
        %v169 = vcvt.s32.f32 %v168
        %v170 = vmul.f32 %v169, 0.0625
        %v171 = vfloor.f32 %v170
        %v172 = vcvt.f32.s32.to.zero.pseudo %v171
        %v173 = vmul.u32 %v172, 16
        %vm174 = vcmp.gt.s32.totalorder %v173, %v168
        %v175 = vsub.s32 %v172, 1
        %v176 = vsel %vm174, %v175, %v172
        %v177 = vadd.s32 %v176, 1
        %v178 = vmul.u32 %v177, 16
        %vm179 = vcmp.le.s32.totalorder %v178, %v168
        %v180 = vsel %vm179, %v177, %v176
        %v181 = vmul.u32 %v180, 16
        %v182 = vsub.s32 %v168, %v181
        %v183 = vcvt.s32.f32 %v180
        %v184 = vmul.f32 %v183, 0.13333334
        %v185 = vsub.f32 %v184, 1.0
        %v186 = vcvt.s32.f32 %v182
        %v187 = vmul.f32 %v186, 0.13333334
        %v188 = vsub.f32 %v187, 1.0
        %s189 = scalar_lea.vmem %s151, 8 [#allocation5]
        %190 = vst [vmem:[%s189] sm:$0x3] %v185
        %s191 = scalar_lea.vmem %s151, 10 [#allocation5]
        %192 = vst [vmem:[%s191] sm:$0x3] %v188
        %s193 = sand.u32 %s68, 1
        %s194 = scalar_lea.sflag [#allocation4], %s193
        %s195 = sand.u32 %s68, 1
        %s196 = smul.addr %s195, 12
        %s197 = scalar_lea.vmem [#allocation5], %s196
        // Predicated region
        $region29: #{tpu_custom_call.1} parent=23 // pred_check
          %p198 = pneg %p78
        $region30: #{tpu_custom_call.1} parent=23 // pred_check_branch
          %200 = sbr.rel (%p198) target = $region32
        $region31: #{tpu_custom_call.1} parent=23 // pred_region
          %s202 = ssub.s32 192, 192
          %203 = vsyncadd %s194, %s202
          %s204 = smul.addr %s22, 6
          %s205 = sadd.s32 %s23, %s204
          %s206 = smul.addr %s205, 32
          %s207 = scalar_lea.hbm %s1, %s206
          %s208 = sshll.u32 %s197, 4
          %s209 = int_to_ptr.vmem [resolvable:$true] %s208
          %214 = dma.vmem_to_hbm [thread:$0]  %s209, 192, %s207, %s194, 32, 32, 2
        $region32: #{tpu_custom_call.1} parent=23 // pred_fallthru
          _
      $region24: #{tpu_custom_call.1} parent=5 // pred_fallthru
        _
      %p215 = scmp.le.s32.totalorder 2, %s13
      // Predicated region
      $region33: #{tpu_custom_call.1} parent=5 // pred_check
        %p216 = pneg %p215
      $region34: #{tpu_custom_call.1} parent=5 // pred_check_branch
        %218 = sbr.rel (%p216) target = $region36
      $region35: #{tpu_custom_call.1} parent=5 // pred_region
        %s219 = ssub.s32 %s13, 2
        // Predicated region
        $region37: #{tpu_custom_call.1} parent=35 // pred_check
          %p220 = pneg %p84
        $region38: #{tpu_custom_call.1} parent=35 // pred_check_branch
          %222 = sbr.rel (%p220) target = $region40
        $region39: #{tpu_custom_call.1} parent=35 // pred_region
          %s223 = sand.u32 %s69, 1
          %s224 = scalar_lea.sflag [#allocation4], %s223
          %s225 = sand.u32 %s69, 1
          %s226 = smul.addr %s225, 12
          %s227 = scalar_lea.vmem [#allocation5], %s226
          %228 = dma.done %s224, 192
        $region40: #{tpu_custom_call.1} parent=35 // pred_fallthru
          _
      $region36: #{tpu_custom_call.1} parent=5 // pred_fallthru
        _
    $region6: #{tpu_custom_call.1} parent=1 // loop_footer
      %s17 = sadd.s32 1, %s13
    $region7: #{tpu_custom_call.1} parent=1 // loop_footer_branch
      %12 = sbr.rel target = $region3
    $region8: #{tpu_custom_call.1} parent=1 // loop_exit
      _
    %229 = vsyncpa [#allocation3], 1
    %s230 = scalar_lea.sflag [#allocation3], 1
    %231 = vsyncpa %s230, 1
    %232 = vsyncpa [#allocation4], 1
    %s233 = scalar_lea.sflag [#allocation4], 1
    %234 = vsyncpa %s233, 1

</llo_original>
